<compile_context>
chip_gen: v6e
topology: v6e:2x2x1
jax: 0.10.0
libtpu: 0.0.40
codegen_flags: <defaults>
</compile_context>

<pallas_src>
import jax
import jax.numpy as jnp
from jax.experimental import pallas as pl
from jax.experimental.pallas import tpu as pltpu

# padded tile sizes (aligned to the (8, 128) f32 vreg tile)
PM = 8     # padded batch          (real: 1)
PK = 8     # padded in_features    (real: 3)   -- was 128 before
PN = 128   # padded out_features   (real: 6)   -- lane-dense output


def _make_linear_add_relu_kernel(k_real: int):
    """Kernel factory; K is a static Python constant so the FMA is unrolled."""

    def kernel(x_ref, w_ref, bo_ref, o_ref):
        # x_ref:  (PM, PK)  zero-padded input
        # w_ref:  (PK, PN)  zero-padded weight^T (pre-padded at init time)
        # bo_ref: (1,  PN)  bias + other, pre-folded and pre-padded
        # o_ref:  (PM, PN)  output
        x = x_ref[...]
        w = w_ref[...]
        # 3-term broadcast FMA on the VPU instead of an MXU matmul pass.
        acc = bo_ref[...] + x[:, 0:1] * w[0:1, :]
        for k in range(1, k_real):
            acc = acc + x[:, k:k + 1] * w[k:k + 1, :]
        o_ref[...] = jnp.maximum(acc, 0.0)

    return kernel


def prepare_params(weight, bias, other):
    """One-time (init-path) preparation: transpose/pad weight, fold bias+other.

    weight: [N, K] (PyTorch Linear layout), bias: [N], other: [1, N].
    Returns (w_p [PK, PN], bo_p [1, PN]) — padded constants reused every call.
    """
    n_out, k_in = weight.shape
    w_p = jnp.zeros((PK, PN), jnp.float32).at[:k_in, :n_out].set(
        weight.T.astype(jnp.float32))
    bo = bias.astype(jnp.float32)[None, :] + other.astype(jnp.float32)  # (1, N)
    bo_p = jnp.zeros((1, PN), jnp.float32).at[:, :n_out].set(bo)
    return w_p, bo_p


def linear_add_relu(x, w_p, bo_p, n_out):
    """x: [B, 3] -> relu(x @ W^T + bias + other): [B, n_out]."""
    b, k_in = x.shape

    # only per-call padding: the (tiny) activation
    x_p = jnp.zeros((PM, PK), jnp.float32).at[:b, :k_in].set(
        x.astype(jnp.float32))

    out_padded = pl.pallas_call(
        _make_linear_add_relu_kernel(k_in),
        out_shape=jax.ShapeDtypeStruct((PM, PN), jnp.float32),
        # no grid: single invocation, full-array VMEM residency, no pipeline
        # bookkeeping or double-buffer allocation.
        in_specs=[
            pl.BlockSpec(memory_space=pltpu.MemorySpace.VMEM),
            pl.BlockSpec(memory_space=pltpu.MemorySpace.VMEM),
            pl.BlockSpec(memory_space=pltpu.MemorySpace.VMEM),
        ],
        out_specs=pl.BlockSpec(memory_space=pltpu.MemorySpace.VMEM),
    )(x_p, w_p, bo_p)

    return out_padded[:b, :n_out]


if __name__ == "__main__":
    key = jax.random.PRNGKey(0)
    k_x, k_w, k_b, k_o = jax.random.split(key, 4)

    B, IN, OUT = 1, 3, 6
    x1 = jax.random.normal(k_x, (B, IN), jnp.float32)
    weight = jax.random.normal(k_w, (OUT, IN), jnp.float32) * 0.1   # Linear(3, 6) weight
    bias = jax.random.normal(k_b, (OUT,), jnp.float32) * 0.1        # Linear(3, 6) bias
    other = jax.random.normal(k_o, (1, OUT), jnp.float32)

    # init-time prep (hoisted out of the per-call path)
    w_p, bo_p = prepare_params(weight, bias, other)

    out = linear_add_relu(x1, w_p, bo_p, OUT)
    jax.block_until_ready(out)

    # reference check in plain JAX
    ref = jnp.maximum(x1 @ weight.T + bias + other, 0.0)
    assert out.shape == (B, OUT)
    assert jnp.allclose(out, ref, atol=1e-5), (out, ref)

    print("KERNEL_OK")
</pallas_src>

<mosaic_0001>
module attributes {stable_mosaic.version = 11 : i64} {
  func.func @kernel(%arg0: memref<8x8xf32, #tpu.memory_space<vmem>>, %arg1: memref<8x128xf32, #tpu.memory_space<vmem>>, %arg2: memref<1x128xf32, #tpu.memory_space<vmem>>, %arg3: memref<8x128xf32, #tpu.memory_space<vmem>>) attributes {dimension_semantics = [], scalar_prefetch = 0 : i64, scratch_operands = 0 : i64, tpu.core_type = #tpu.core_type<tc>} {
    %c0 = arith.constant 0 : index
    %c0_0 = arith.constant 0 : index
    %0 = vector.load %arg0[%c0, %c0_0] : memref<8x8xf32, #tpu.memory_space<vmem>>, vector<8x8xf32>
    %c0_1 = arith.constant 0 : index
    %c0_2 = arith.constant 0 : index
    %1 = vector.load %arg1[%c0_1, %c0_2] : memref<8x128xf32, #tpu.memory_space<vmem>>, vector<8x128xf32>
    %c0_3 = arith.constant 0 : index
    %c0_4 = arith.constant 0 : index
    %2 = vector.load %arg2[%c0_3, %c0_4] : memref<1x128xf32, #tpu.memory_space<vmem>>, vector<1x128xf32>
    %3 = vector.extract_strided_slice %0 {offsets = [0, 0], sizes = [8, 1], strides = [1, 1]} : vector<8x8xf32> to vector<8x1xf32>
    %4 = vector.extract_strided_slice %1 {offsets = [0, 0], sizes = [1, 128], strides = [1, 1]} : vector<8x128xf32> to vector<1x128xf32>
    %5 = vector.broadcast %3 : vector<8x1xf32> to vector<8x128xf32>
    %6 = vector.broadcast %4 : vector<1x128xf32> to vector<8x128xf32>
    %7 = arith.mulf %5, %6 : vector<8x128xf32>
    %8 = vector.broadcast %2 : vector<1x128xf32> to vector<8x128xf32>
    %9 = arith.addf %8, %7 : vector<8x128xf32>
    %10 = vector.extract_strided_slice %0 {offsets = [0, 1], sizes = [8, 1], strides = [1, 1]} : vector<8x8xf32> to vector<8x1xf32>
    %11 = vector.extract_strided_slice %1 {offsets = [1, 0], sizes = [1, 128], strides = [1, 1]} : vector<8x128xf32> to vector<1x128xf32>
    %12 = vector.broadcast %10 : vector<8x1xf32> to vector<8x128xf32>
    %13 = vector.broadcast %11 : vector<1x128xf32> to vector<8x128xf32>
    %14 = arith.mulf %12, %13 : vector<8x128xf32>
    %15 = arith.addf %9, %14 : vector<8x128xf32>
    %16 = vector.extract_strided_slice %0 {offsets = [0, 2], sizes = [8, 1], strides = [1, 1]} : vector<8x8xf32> to vector<8x1xf32>
    %17 = vector.extract_strided_slice %1 {offsets = [2, 0], sizes = [1, 128], strides = [1, 1]} : vector<8x128xf32> to vector<1x128xf32>
    %18 = vector.broadcast %16 : vector<8x1xf32> to vector<8x128xf32>
    %19 = vector.broadcast %17 : vector<1x128xf32> to vector<8x128xf32>
    %20 = arith.mulf %18, %19 : vector<8x128xf32>
    %21 = arith.addf %15, %20 : vector<8x128xf32>
    %cst = arith.constant 0.000000e+00 : f32
    %22 = vector.broadcast %cst : f32 to vector<8x128xf32>
    %23 = arith.maximumf %21, %22 : vector<8x128xf32>
    %c0_5 = arith.constant 0 : index
    %c0_6 = arith.constant 0 : index
    %24 = vector.load %arg3[%c0_5, %c0_6] : memref<8x128xf32, #tpu.memory_space<vmem>>, vector<8x128xf32>
    tpu.vector_store %arg3[%c0_5, %c0_6], %23 {strides = array<i32>} : memref<8x128xf32, #tpu.memory_space<vmem>>, vector<8x128xf32>,
    return
  }
}

</mosaic_0001>

<llo_original>
// kernel: tpu_custom_call.1
$region0: #{tpu_custom_call.1}
  #allocation0 [shape = 'u32[]', space=smem, size = 0x4, offset = 0x4, fixed_abs, tag = 'smem constant byte address 0x4 - core index']
  #allocation1 [shape = 'u32[144,128]{1,0:T(1,128)}', space=vmem, size = 0x12000, scoped, tag = 'internal scratch']
  %s0 = inlined_call_operand.hbm [shape: f32[8,8], index: 0, kind: input, shape index: {}]
  %s1 = inlined_call_operand.hbm [shape: f32[8,128], index: 1, kind: input, shape index: {}]
  %s2 = inlined_call_operand.vmem [shape: f32[1,128], index: 2, kind: input, shape index: {}]
  %s3 = inlined_call_operand.hbm [shape: f32[8,128], index: 3, kind: output, shape index: {}]
  %s4 = sld [smem:[#allocation0]]
  $region30: #{tpu_custom_call.1} parent=0
    _
  %s6 = ssub.s32 1, %s4
  %s7 = scalar_select 0, %s6, %s4
  $region1: #{tpu_custom_call.1} parent=0
    #allocation2 [shape = 'u8[4096]{0}', space=vmem, size = 0x1000, scoped, tag = 'input window, operand 0, single buffered']
    #allocation3 [shape = 's32[1]{0}', space=sflag, size = 0x4, scoped, tag = 'scoped memory for tpu_custom_call.1']
    #allocation4 [shape = 's32[1]{0}', space=sflag, size = 0x4, scoped, tag = 'scoped memory for tpu_custom_call.1']
    #allocation5 [shape = 'u8[4096]{0}', space=vmem, size = 0x1000, scoped, tag = 'input window, operand 1, single buffered']
    #allocation6 [shape = 's32[1]{0}', space=sflag, size = 0x4, scoped, tag = 'scoped memory for tpu_custom_call.1']
    #allocation7 [shape = 'u8[4096]{0}', space=vmem, size = 0x1000, scoped, tag = 'output window, operand 0, single buffered']
    %8 = vsyncpa [#allocation3], 0
    %9 = vsyncpa [#allocation6], 0
    %10 = vsyncpa [#allocation4], 0
    // Predicated region
    $region2: #{tpu_custom_call.1} parent=1 // pred_check
      _
    $region3: #{tpu_custom_call.1} parent=1 // pred_check_branch
      %12 = sbr.rel (0) target = $region5
    $region4: #{tpu_custom_call.1} parent=1 // pred_region
      %s14 = ssub.s32 128, 128
      %15 = vsyncadd [#allocation3], %s14
      %s17 = sshll.u32 [#allocation2], 4
      %s18 = int_to_ptr.vmem [resolvable:$true] %s17
      %20 = dma.hbm_to_vmem [thread:$0]  %s0, 128, %s18, [#allocation3]
    $region5: #{tpu_custom_call.1} parent=1 // pred_fallthru
      _
    // Predicated region
    $region6: #{tpu_custom_call.1} parent=1 // pred_check
      _
    $region7: #{tpu_custom_call.1} parent=1 // pred_check_branch
      %22 = sbr.rel (0) target = $region9
    $region8: #{tpu_custom_call.1} parent=1 // pred_region
      %s24 = ssub.s32 128, 128
      %25 = vsyncadd [#allocation6], %s24
      %s27 = sshll.u32 [#allocation5], 4
      %s28 = int_to_ptr.vmem [resolvable:$true] %s27
      %30 = dma.hbm_to_vmem [thread:$0]  %s1, 128, %s28, [#allocation6]
    $region9: #{tpu_custom_call.1} parent=1 // pred_fallthru
      _
    // Predicated region
    $region10: #{tpu_custom_call.1} parent=1 // pred_check
      _
    $region11: #{tpu_custom_call.1} parent=1 // pred_check_branch
      %32 = sbr.rel (0) target = $region13
    $region12: #{tpu_custom_call.1} parent=1 // pred_region
      _
    $region13: #{tpu_custom_call.1} parent=1 // pred_fallthru
      _
    // Predicated region
    $region14: #{tpu_custom_call.1} parent=1 // pred_check
      _
    $region15: #{tpu_custom_call.1} parent=1 // pred_check_branch
      %34 = sbr.rel (0) target = $region17
    $region16: #{tpu_custom_call.1} parent=1 // pred_region
      %35 = dma.done [#allocation3], 128
    $region17: #{tpu_custom_call.1} parent=1 // pred_fallthru
      _
    // Predicated region
    $region18: #{tpu_custom_call.1} parent=1 // pred_check
      _
    $region19: #{tpu_custom_call.1} parent=1 // pred_check_branch
      %37 = sbr.rel (0) target = $region21
    $region20: #{tpu_custom_call.1} parent=1 // pred_region
      %38 = dma.done [#allocation6], 128
    $region21: #{tpu_custom_call.1} parent=1 // pred_fallthru
      _
    %v39 = vld [vmem:[#allocation2] sm:$0xff]
    %v40 = vld [vmem:[#allocation5] sm:$0xff]
    %v41 = vld [vmem:[%s2] sm:$0x1]
    %43 = vset.pattern.permute.xlu0 0
    %44 = vperm.xlu0 %43, %v39
    %v45 = vpop.permute.xlu0 %44
    %v47 = vlaneseq
    %v48 = vshrl.u32 %v47, 7
    %v49 = vsub.s32 0, %v48
    %v50 = vrot.slane %v40, %v49
    %v51 = vmul.f32 %v45, %v50
    %v53 = vlaneseq
    %v54 = vshrl.u32 %v53, 7
    %v55 = vsub.s32 0, %v54
    %v56 = vrot.slane %v41, %v55
    %v58 = vadd.f32 %v56, %v51
    %59 = vset.pattern.permute.xlu0 1
    %60 = vperm.xlu0 %59, %v39
    %v61 = vpop.permute.xlu0 %60
    %v63 = vlaneseq
    %v64 = vshrl.u32 %v63, 7
    %v65 = vsub.s32 1, %v64
    %v66 = vrot.slane %v40, %v65
    %v67 = vmul.f32 %v61, %v66
    %v68 = vadd.f32 %v58, %v67
    %69 = vset.pattern.permute.xlu0 2
    %70 = vperm.xlu0 %69, %v39
    %v71 = vpop.permute.xlu0 %70
    %v73 = vlaneseq
    %v74 = vshrl.u32 %v73, 7
    %v75 = vsub.s32 2, %v74
    %v76 = vrot.slane %v40, %v75
    %v77 = vmul.f32 %v71, %v76
    %v78 = vadd.f32 %v68, %v77
    %v79 = vmax.f32 %v78, 0.0
    %80 = vst [vmem:[#allocation7] sm:$0xff] %v79
    // Predicated region
    $region22: #{tpu_custom_call.1} parent=1 // pred_check
      _
    $region23: #{tpu_custom_call.1} parent=1 // pred_check_branch
      %82 = sbr.rel (0) target = $region25
    $region24: #{tpu_custom_call.1} parent=1 // pred_region
      %s84 = ssub.s32 128, 128
      %85 = vsyncadd [#allocation4], %s84
      %s87 = sshll.u32 [#allocation7], 4
      %s88 = int_to_ptr.vmem [resolvable:$true] %s87
      %90 = dma.vmem_to_hbm [thread:$0]  %s88, 128, %s3, [#allocation4]
    $region25: #{tpu_custom_call.1} parent=1 // pred_fallthru
      _
    // Predicated region
    $region26: #{tpu_custom_call.1} parent=1 // pred_check
      _
    $region27: #{tpu_custom_call.1} parent=1 // pred_check_branch
      %92 = sbr.rel (0) target = $region29
    $region28: #{tpu_custom_call.1} parent=1 // pred_region
      %93 = dma.done [#allocation4], 128
    $region29: #{tpu_custom_call.1} parent=1 // pred_fallthru
      _
    %94 = vsyncpa [#allocation3], 1
    %95 = vsyncpa [#allocation6], 1
    %96 = vsyncpa [#allocation4], 1

</llo_original>
